<compile_context>
chip_gen: v7x
topology: tpu7x:2x2x1
jax: 0.10.0
libtpu: 0.0.40
codegen_flags: <defaults>
</compile_context>

<pallas_src>
import jax
import jax.numpy as jnp
from jax import lax
from jax.experimental import pallas as pl
from jax.experimental.pallas import tpu as pltpu

DILATIONS = (8, 4, 2, 1)      # the four dilated ConvTranspose1d layers
FINAL_K = 16
FINAL_STRIDE = 8
PAD = max(DILATIONS)          # halo size = max dilation


def deep_decoder_kernel(x_ref, w_ref, b_ref, alpha_ref, wf_ref, z_ref, act_ref):
    """One batch element per grid step.

    x_ref:     (1, L, N)        VMEM  bf16   input chunk
    w_ref:     (4, 3N, N)       VMEM  bf16   stacked taps [W0; W1; W2] per layer
    b_ref:     (4, N)           VMEM  f32    per-layer bias
    alpha_ref: (4,)             SMEM  f32    PReLU scalar per layer
    wf_ref:    (N, 16)          VMEM  bf16   final ConvTranspose1d weight [in, tap]
    z_ref:     (1, L, 16)       VMEM  f32    raw final projection x @ wf
    act_ref:   (L + 2*PAD, N)   VMEM  f32    activation scratch with zero halos
    """
    L = x_ref.shape[1]
    N = x_ref.shape[2]

    # Zero halos once; the center holds the current layer's activation (f32).
    act_ref[:PAD, :] = jnp.zeros((PAD, N), jnp.float32)
    act_ref[PAD + L:, :] = jnp.zeros((PAD, N), jnp.float32)
    act_ref[PAD:PAD + L, :] = x_ref[0].astype(jnp.float32)

    for li, d in enumerate(DILATIONS):
        # Shifted views come straight out of the haloed scratch (no concat-pad).
        x_p = act_ref[PAD + d:PAD + d + L, :]      # x[t + d]  (zero past the end)
        x_c = act_ref[PAD:PAD + L, :]              # x[t]
        x_m = act_ref[PAD - d:PAD - d + L, :]      # x[t - d]  (zero before start)

        # Fused 3-tap matmul: (L, 3N) @ (3N, N), bf16 operands, f32 accumulate.
        xcat = jnp.concatenate([x_p, x_c, x_m], axis=-1).astype(jnp.bfloat16)
        y = (jnp.dot(xcat, w_ref[li], preferred_element_type=jnp.float32)
             + b_ref[li:li + 1, :])

        alpha = alpha_ref[li]                      # PReLU (single shared param)
        act_ref[PAD:PAD + L, :] = jnp.where(y > 0, y, alpha * y)

    # Final ConvTranspose1d(N, 1, k=16, stride=8): one matmul, raw (L, 16) out.
    # out[8q + r] = bias + z[q, r] + z[q-1, r+8] is assembled in the wrapper.
    x_final = act_ref[PAD:PAD + L, :].astype(jnp.bfloat16)
    z_ref[0] = jnp.dot(x_final, wf_ref[...], preferred_element_type=jnp.float32)


def deep_decoder_forward(x_ncl, params):
    """x_ncl: (B, N, L) or (N, L) float32  ->  (B, 8L + 8) (mirrors torch.squeeze)."""
    if x_ncl.ndim == 2:                            # unbatched (N, L) path
        x_ncl = x_ncl[None]
    B, N, L = x_ncl.shape
    x = jnp.transpose(x_ncl, (0, 2, 1)).astype(jnp.bfloat16)        # (B, L, N)

    # Pre-stacked / pre-cast weights: one contiguous (3N, N) bf16 tile per layer.
    w_stack = params["w"].reshape(4, 3 * N, N).astype(jnp.bfloat16)  # [W0;W1;W2]
    wf = params["wf"].astype(jnp.bfloat16)
    b = params["b"].astype(jnp.float32)
    alpha = params["alpha"].astype(jnp.float32)

    z = pl.pallas_call(
        deep_decoder_kernel,
        out_shape=jax.ShapeDtypeStruct((B, L, FINAL_K), jnp.float32),
        grid=(B,),
        in_specs=[
            pl.BlockSpec((1, L, N), lambda bi: (bi, 0, 0)),          # x (bf16)
            pl.BlockSpec((4, 3 * N, N), lambda bi: (0, 0, 0)),       # stacked w
            pl.BlockSpec((4, N), lambda bi: (0, 0)),                 # bias
            pl.BlockSpec(memory_space=pltpu.MemorySpace.SMEM),       # alpha
            pl.BlockSpec((N, FINAL_K), lambda bi: (0, 0)),           # wf
        ],
        out_specs=pl.BlockSpec((1, L, FINAL_K), lambda bi: (bi, 0, 0)),
        scratch_shapes=[pltpu.VMEM((L + 2 * PAD, N), jnp.float32)],
        compiler_params=pltpu.CompilerParams(
            dimension_semantics=("parallel",),
            vmem_limit_bytes=64 * 1024 * 1024,     # explicit budget (v7x: 64 MiB phys)
        ),
    )(x, w_stack, b, alpha, wf)

    # Stride-8 overlap-add + final bias, done lane-trivially by XLA outside.
    #   out[b, 8q + r] = bf + z[b, q, r] + z[b, q-1, r + 8]
    z1 = z[:, :, :FINAL_STRIDE]                    # contribution of x[q]
    z2 = z[:, :, FINAL_STRIDE:]                    # contribution of x[q-1]
    zrow = jnp.zeros((B, 1, FINAL_STRIDE), jnp.float32)
    out = (jnp.concatenate([z1, zrow], axis=1)
           + jnp.concatenate([zrow, z2], axis=1)
           + params["bf"][0])
    T = FINAL_STRIDE * (L + 1)                     # 8L + 8
    out = out.reshape(B, 1, T)

    # Replicate torch.squeeze(x) with the dim()==1 special case.
    squeezed = jnp.squeeze(out)
    if squeezed.ndim == 1:
        return jnp.squeeze(out, axis=1)
    return squeezed


def ref_forward(x_ncl, params):
    """Pure-JAX reference via lax.conv_general_dilated (independent code path).

    Matmul operands are cast to bf16 with f32 accumulation, mirroring the
    kernel's MXU precision, so the comparison isolates structural correctness.
    """
    h = x_ncl.astype(jnp.float32)                  # (B, N, L)
    for li, d in enumerate(DILATIONS):
        w_l = params["w"][li]                      # (3, N_in, N_out) = [k, i, o]
        # equivalent regular dilated conv: rhs[o, i, j] = w_pt[i, o, 2-j]
        rhs = jnp.transpose(w_l[::-1], (2, 1, 0))  # (N_out, N_in, 3)
        y = lax.conv_general_dilated(
            h.astype(jnp.bfloat16), rhs.astype(jnp.bfloat16),
            window_strides=(1,), padding=[(d, d)], rhs_dilation=(d,),
            dimension_numbers=("NCH", "OIH", "NCH"),
            preferred_element_type=jnp.float32)
        y = y + params["b"][li][None, :, None]
        a = params["alpha"][li]
        h = jnp.where(y > 0, y, a * y)
    wf = params["wf"]                              # (N, 16) = [i, k]
    rhs_f = wf[:, ::-1][None, :, :]                # (1, N, 16)
    y = lax.conv_general_dilated(
        h.astype(jnp.bfloat16), rhs_f.astype(jnp.bfloat16),
        window_strides=(1,), padding=[(FINAL_K - 1, FINAL_K - 1)],
        lhs_dilation=(FINAL_STRIDE,), dimension_numbers=("NCH", "OIH", "NCH"),
        preferred_element_type=jnp.float32)
    y = y + params["bf"][0]
    return jnp.squeeze(y, axis=1)                  # (B, 8L + 8)


def make_params(key, N):
    ks = jax.random.split(key, 5)
    return {
        # w[layer, tap, in, out]  <->  PyTorch ConvTranspose1d weight[in, out, tap]
        "w": (jax.random.normal(ks[0], (4, 3, N, N), jnp.float32) * 0.1),
        "b": (jax.random.normal(ks[1], (4, N), jnp.float32) * 0.1),
        "alpha": jnp.full((4,), 0.25, jnp.float32),          # nn.PReLU() default
        "wf": (jax.random.normal(ks[2], (N, FINAL_K), jnp.float32) * 0.1),
        "bf": (jax.random.normal(ks[3], (1,), jnp.float32) * 0.1),
    }


if __name__ == "__main__":
    B, N, L = 2, 16, 32
    key = jax.random.PRNGKey(0)
    kp, kx = jax.random.split(key)
    params = make_params(kp, N)
    x = jax.random.normal(kx, (B, N, L), jnp.float32)

    out_kernel = jax.block_until_ready(deep_decoder_forward(x, params))
    out_ref = ref_forward(x, params)

    err = float(jnp.max(jnp.abs(out_kernel - out_ref)))
    assert out_kernel.shape == (B, FINAL_STRIDE * L + FINAL_STRIDE), out_kernel.shape
    assert err < 5e-3, f"max abs error vs reference: {err}"
    print("KERNEL_OK")
</pallas_src>

<mosaic_0001>
module attributes {stable_mosaic.version = 11 : i64} {
  func.func @deep_decoder_kernel(%arg0: i32, %arg1: memref<1x32x16xbf16, #tpu.memory_space<vmem>>, %arg2: memref<4x48x16xbf16, #tpu.memory_space<vmem>>, %arg3: memref<4x16xf32, #tpu.memory_space<vmem>>, %arg4: memref<4xf32, #tpu.memory_space<smem>>, %arg5: memref<16x16xbf16, #tpu.memory_space<vmem>>, %arg6: memref<1x32x16xf32, #tpu.memory_space<vmem>>, %arg7: memref<48x16xf32, #tpu.memory_space<vmem>>) attributes {dimension_semantics = [#tpu.dimension_semantics<parallel>], iteration_bounds = array<i64: 2>, scalar_prefetch = 0 : i64, scratch_operands = 1 : i64, tpu.core_type = #tpu.core_type<tc>, window_params = [{transform_indices = @transform_0, window_bounds = array<i64: 1, 32, 16>}, {pipeline_mode = #tpu.pipeline_mode<synchronous>, transform_indices = @transform_1, window_bounds = array<i64: 4, 48, 16>}, {pipeline_mode = #tpu.pipeline_mode<synchronous>, transform_indices = @transform_2, window_bounds = array<i64: 4, 16>}, {transform_indices = @transform_3, window_bounds = array<i64: 4>}, {pipeline_mode = #tpu.pipeline_mode<synchronous>, transform_indices = @transform_4, window_bounds = array<i64: 16, 16>}, {transform_indices = @transform_5, window_bounds = array<i64: 1, 32, 16>}]} {
    %cst = arith.constant 0.000000e+00 : f32
    %0 = vector.broadcast %cst : f32 to vector<8x16xf32>
    %c0 = arith.constant 0 : index
    %c0_0 = arith.constant 0 : index
    %1 = vector.load %arg7[%c0, %c0_0] : memref<48x16xf32, #tpu.memory_space<vmem>>, vector<8x16xf32>
    tpu.vector_store %arg7[%c0, %c0_0], %0 {strides = array<i32>} : memref<48x16xf32, #tpu.memory_space<vmem>>, vector<8x16xf32>,
    %cst_1 = arith.constant 0.000000e+00 : f32
    %2 = vector.broadcast %cst_1 : f32 to vector<8x16xf32>
    %c40 = arith.constant 40 : index
    %c0_2 = arith.constant 0 : index
    %3 = vector.load %arg7[%c40, %c0_2] : memref<48x16xf32, #tpu.memory_space<vmem>>, vector<8x16xf32>
    tpu.vector_store %arg7[%c40, %c0_2], %2 {strides = array<i32>} : memref<48x16xf32, #tpu.memory_space<vmem>>, vector<8x16xf32>,
    %c0_3 = arith.constant 0 : index
    %c0_4 = arith.constant 0 : index
    %c0_5 = arith.constant 0 : index
    %4 = vector.load %arg1[%c0_3, %c0_4, %c0_5] : memref<1x32x16xbf16, #tpu.memory_space<vmem>>, vector<1x32x16xbf16>
    %5 = vector.shape_cast %4 : vector<1x32x16xbf16> to vector<32x16xbf16>
    %6 = arith.extf %5 : vector<32x16xbf16> to vector<32x16xf32>
    %c8 = arith.constant 8 : index
    %c0_6 = arith.constant 0 : index
    %7 = vector.load %arg7[%c8, %c0_6] : memref<48x16xf32, #tpu.memory_space<vmem>>, vector<32x16xf32>
    tpu.vector_store %arg7[%c8, %c0_6], %6 {strides = array<i32>} : memref<48x16xf32, #tpu.memory_space<vmem>>, vector<32x16xf32>,
    %c16 = arith.constant 16 : index
    %c0_7 = arith.constant 0 : index
    %8 = vector.load %arg7[%c16, %c0_7] : memref<48x16xf32, #tpu.memory_space<vmem>>, vector<32x16xf32>
    %c8_8 = arith.constant 8 : index
    %c0_9 = arith.constant 0 : index
    %9 = vector.load %arg7[%c8_8, %c0_9] : memref<48x16xf32, #tpu.memory_space<vmem>>, vector<32x16xf32>
    %c0_10 = arith.constant 0 : index
    %c0_11 = arith.constant 0 : index
    %10 = vector.load %arg7[%c0_10, %c0_11] : memref<48x16xf32, #tpu.memory_space<vmem>>, vector<32x16xf32>
    %11 = tpu.concatenate %8, %9, %10 in 1 : vector<32x16xf32>, vector<32x16xf32>, vector<32x16xf32> -> vector<32x48xf32>
    %12 = arith.truncf %11 : vector<32x48xf32> to vector<32x48xbf16>
    %c0_12 = arith.constant 0 : index
    %c0_13 = arith.constant 0 : index
    %c0_14 = arith.constant 0 : index
    %13 = vector.load %arg2[%c0_12, %c0_13, %c0_14] : memref<4x48x16xbf16, #tpu.memory_space<vmem>>, vector<1x48x16xbf16>
    %14 = vector.shape_cast %13 : vector<1x48x16xbf16> to vector<48x16xbf16>
    %cst_15 = arith.constant dense<0.000000e+00> : vector<32x16xf32>
    %15 = tpu.matmul %12, %14, %cst_15 {dimension_numbers = #tpu.dot_dimension_numbers<[1], [0], [0], [1], [0, 0, 1, 1], [], []>} : vector<32x48xbf16>, vector<48x16xbf16>, vector<32x16xf32> -> vector<32x16xf32>
    %c0_16 = arith.constant 0 : index
    %c0_17 = arith.constant 0 : index
    %16 = vector.load %arg3[%c0_16, %c0_17] : memref<4x16xf32, #tpu.memory_space<vmem>>, vector<1x16xf32>
    %17 = vector.broadcast %16 : vector<1x16xf32> to vector<32x16xf32>
    %18 = arith.addf %15, %17 : vector<32x16xf32>
    %c0_18 = arith.constant 0 : index
    %19 = memref.load %arg4[%c0_18] : memref<4xf32, #tpu.memory_space<smem>>
    %cst_19 = arith.constant 0.000000e+00 : f32
    %20 = vector.broadcast %cst_19 : f32 to vector<32x16xf32>
    %21 = arith.cmpf ogt, %18, %20 : vector<32x16xf32>
    %22 = vector.broadcast %19 : f32 to vector<32x16xf32>
    %23 = arith.mulf %22, %18 : vector<32x16xf32>
    %24 = arith.select %21, %18, %23 : vector<32x16xi1>, vector<32x16xf32>
    %c8_20 = arith.constant 8 : index
    %c0_21 = arith.constant 0 : index
    %25 = vector.load %arg7[%c8_20, %c0_21] : memref<48x16xf32, #tpu.memory_space<vmem>>, vector<32x16xf32>
    tpu.vector_store %arg7[%c8_20, %c0_21], %24 {strides = array<i32>} : memref<48x16xf32, #tpu.memory_space<vmem>>, vector<32x16xf32>,
    %c12 = arith.constant 12 : index
    %c0_22 = arith.constant 0 : index
    %26 = vector.load %arg7[%c12, %c0_22] : memref<48x16xf32, #tpu.memory_space<vmem>>, vector<32x16xf32>
    %c8_23 = arith.constant 8 : index
    %c0_24 = arith.constant 0 : index
    %27 = vector.load %arg7[%c8_23, %c0_24] : memref<48x16xf32, #tpu.memory_space<vmem>>, vector<32x16xf32>
    %c4 = arith.constant 4 : index
    %c0_25 = arith.constant 0 : index
    %28 = vector.load %arg7[%c4, %c0_25] : memref<48x16xf32, #tpu.memory_space<vmem>>, vector<32x16xf32>
    %29 = tpu.concatenate %26, %27, %28 in 1 : vector<32x16xf32>, vector<32x16xf32>, vector<32x16xf32> -> vector<32x48xf32>
    %30 = arith.truncf %29 : vector<32x48xf32> to vector<32x48xbf16>
    %c1 = arith.constant 1 : index
    %c0_26 = arith.constant 0 : index
    %c0_27 = arith.constant 0 : index
    %31 = vector.load %arg2[%c1, %c0_26, %c0_27] : memref<4x48x16xbf16, #tpu.memory_space<vmem>>, vector<1x48x16xbf16>
    %32 = vector.shape_cast %31 : vector<1x48x16xbf16> to vector<48x16xbf16>
    %cst_28 = arith.constant dense<0.000000e+00> : vector<32x16xf32>
    %33 = tpu.matmul %30, %32, %cst_28 {dimension_numbers = #tpu.dot_dimension_numbers<[1], [0], [0], [1], [0, 0, 1, 1], [], []>} : vector<32x48xbf16>, vector<48x16xbf16>, vector<32x16xf32> -> vector<32x16xf32>
    %c1_29 = arith.constant 1 : index
    %c0_30 = arith.constant 0 : index
    %34 = vector.load %arg3[%c1_29, %c0_30] : memref<4x16xf32, #tpu.memory_space<vmem>>, vector<1x16xf32>
    %35 = vector.broadcast %34 : vector<1x16xf32> to vector<32x16xf32>
    %36 = arith.addf %33, %35 : vector<32x16xf32>
    %c1_31 = arith.constant 1 : index
    %37 = memref.load %arg4[%c1_31] : memref<4xf32, #tpu.memory_space<smem>>
    %cst_32 = arith.constant 0.000000e+00 : f32
    %38 = vector.broadcast %cst_32 : f32 to vector<32x16xf32>
    %39 = arith.cmpf ogt, %36, %38 : vector<32x16xf32>
    %40 = vector.broadcast %37 : f32 to vector<32x16xf32>
    %41 = arith.mulf %40, %36 : vector<32x16xf32>
    %42 = arith.select %39, %36, %41 : vector<32x16xi1>, vector<32x16xf32>
    %c8_33 = arith.constant 8 : index
    %c0_34 = arith.constant 0 : index
    %43 = vector.load %arg7[%c8_33, %c0_34] : memref<48x16xf32, #tpu.memory_space<vmem>>, vector<32x16xf32>
    tpu.vector_store %arg7[%c8_33, %c0_34], %42 {strides = array<i32>} : memref<48x16xf32, #tpu.memory_space<vmem>>, vector<32x16xf32>,
    %c10 = arith.constant 10 : index
    %c0_35 = arith.constant 0 : index
    %44 = vector.load %arg7[%c10, %c0_35] : memref<48x16xf32, #tpu.memory_space<vmem>>, vector<32x16xf32>
    %c8_36 = arith.constant 8 : index
    %c0_37 = arith.constant 0 : index
    %45 = vector.load %arg7[%c8_36, %c0_37] : memref<48x16xf32, #tpu.memory_space<vmem>>, vector<32x16xf32>
    %c6 = arith.constant 6 : index
    %c0_38 = arith.constant 0 : index
    %46 = vector.load %arg7[%c6, %c0_38] : memref<48x16xf32, #tpu.memory_space<vmem>>, vector<32x16xf32>
    %47 = tpu.concatenate %44, %45, %46 in 1 : vector<32x16xf32>, vector<32x16xf32>, vector<32x16xf32> -> vector<32x48xf32>
    %48 = arith.truncf %47 : vector<32x48xf32> to vector<32x48xbf16>
    %c2 = arith.constant 2 : index
    %c0_39 = arith.constant 0 : index
    %c0_40 = arith.constant 0 : index
    %49 = vector.load %arg2[%c2, %c0_39, %c0_40] : memref<4x48x16xbf16, #tpu.memory_space<vmem>>, vector<1x48x16xbf16>
    %50 = vector.shape_cast %49 : vector<1x48x16xbf16> to vector<48x16xbf16>
    %cst_41 = arith.constant dense<0.000000e+00> : vector<32x16xf32>
    %51 = tpu.matmul %48, %50, %cst_41 {dimension_numbers = #tpu.dot_dimension_numbers<[1], [0], [0], [1], [0, 0, 1, 1], [], []>} : vector<32x48xbf16>, vector<48x16xbf16>, vector<32x16xf32> -> vector<32x16xf32>
    %c2_42 = arith.constant 2 : index
    %c0_43 = arith.constant 0 : index
    %52 = vector.load %arg3[%c2_42, %c0_43] : memref<4x16xf32, #tpu.memory_space<vmem>>, vector<1x16xf32>
    %53 = vector.broadcast %52 : vector<1x16xf32> to vector<32x16xf32>
    %54 = arith.addf %51, %53 : vector<32x16xf32>
    %c2_44 = arith.constant 2 : index
    %55 = memref.load %arg4[%c2_44] : memref<4xf32, #tpu.memory_space<smem>>
    %cst_45 = arith.constant 0.000000e+00 : f32
    %56 = vector.broadcast %cst_45 : f32 to vector<32x16xf32>
    %57 = arith.cmpf ogt, %54, %56 : vector<32x16xf32>
    %58 = vector.broadcast %55 : f32 to vector<32x16xf32>
    %59 = arith.mulf %58, %54 : vector<32x16xf32>
    %60 = arith.select %57, %54, %59 : vector<32x16xi1>, vector<32x16xf32>
    %c8_46 = arith.constant 8 : index
    %c0_47 = arith.constant 0 : index
    %61 = vector.load %arg7[%c8_46, %c0_47] : memref<48x16xf32, #tpu.memory_space<vmem>>, vector<32x16xf32>
    tpu.vector_store %arg7[%c8_46, %c0_47], %60 {strides = array<i32>} : memref<48x16xf32, #tpu.memory_space<vmem>>, vector<32x16xf32>,
    %c9 = arith.constant 9 : index
    %c0_48 = arith.constant 0 : index
    %62 = vector.load %arg7[%c9, %c0_48] : memref<48x16xf32, #tpu.memory_space<vmem>>, vector<32x16xf32>
    %c8_49 = arith.constant 8 : index
    %c0_50 = arith.constant 0 : index
    %63 = vector.load %arg7[%c8_49, %c0_50] : memref<48x16xf32, #tpu.memory_space<vmem>>, vector<32x16xf32>
    %c7 = arith.constant 7 : index
    %c0_51 = arith.constant 0 : index
    %64 = vector.load %arg7[%c7, %c0_51] : memref<48x16xf32, #tpu.memory_space<vmem>>, vector<32x16xf32>
    %65 = tpu.concatenate %62, %63, %64 in 1 : vector<32x16xf32>, vector<32x16xf32>, vector<32x16xf32> -> vector<32x48xf32>
    %66 = arith.truncf %65 : vector<32x48xf32> to vector<32x48xbf16>
    %c3 = arith.constant 3 : index
    %c0_52 = arith.constant 0 : index
    %c0_53 = arith.constant 0 : index
    %67 = vector.load %arg2[%c3, %c0_52, %c0_53] : memref<4x48x16xbf16, #tpu.memory_space<vmem>>, vector<1x48x16xbf16>
    %68 = vector.shape_cast %67 : vector<1x48x16xbf16> to vector<48x16xbf16>
    %cst_54 = arith.constant dense<0.000000e+00> : vector<32x16xf32>
    %69 = tpu.matmul %66, %68, %cst_54 {dimension_numbers = #tpu.dot_dimension_numbers<[1], [0], [0], [1], [0, 0, 1, 1], [], []>} : vector<32x48xbf16>, vector<48x16xbf16>, vector<32x16xf32> -> vector<32x16xf32>
    %c3_55 = arith.constant 3 : index
    %c0_56 = arith.constant 0 : index
    %70 = vector.load %arg3[%c3_55, %c0_56] : memref<4x16xf32, #tpu.memory_space<vmem>>, vector<1x16xf32>
    %71 = vector.broadcast %70 : vector<1x16xf32> to vector<32x16xf32>
    %72 = arith.addf %69, %71 : vector<32x16xf32>
    %c3_57 = arith.constant 3 : index
    %73 = memref.load %arg4[%c3_57] : memref<4xf32, #tpu.memory_space<smem>>
    %cst_58 = arith.constant 0.000000e+00 : f32
    %74 = vector.broadcast %cst_58 : f32 to vector<32x16xf32>
    %75 = arith.cmpf ogt, %72, %74 : vector<32x16xf32>
    %76 = vector.broadcast %73 : f32 to vector<32x16xf32>
    %77 = arith.mulf %76, %72 : vector<32x16xf32>
    %78 = arith.select %75, %72, %77 : vector<32x16xi1>, vector<32x16xf32>
    %c8_59 = arith.constant 8 : index
    %c0_60 = arith.constant 0 : index
    %79 = vector.load %arg7[%c8_59, %c0_60] : memref<48x16xf32, #tpu.memory_space<vmem>>, vector<32x16xf32>
    tpu.vector_store %arg7[%c8_59, %c0_60], %78 {strides = array<i32>} : memref<48x16xf32, #tpu.memory_space<vmem>>, vector<32x16xf32>,
    %c8_61 = arith.constant 8 : index
    %c0_62 = arith.constant 0 : index
    %80 = vector.load %arg7[%c8_61, %c0_62] : memref<48x16xf32, #tpu.memory_space<vmem>>, vector<32x16xf32>
    %81 = arith.truncf %80 : vector<32x16xf32> to vector<32x16xbf16>
    %c0_63 = arith.constant 0 : index
    %c0_64 = arith.constant 0 : index
    %82 = vector.load %arg5[%c0_63, %c0_64] : memref<16x16xbf16, #tpu.memory_space<vmem>>, vector<16x16xbf16>
    %cst_65 = arith.constant dense<0.000000e+00> : vector<32x16xf32>
    %83 = tpu.matmul %81, %82, %cst_65 {dimension_numbers = #tpu.dot_dimension_numbers<[1], [0], [0], [1], [0, 0, 1, 1], [], []>} : vector<32x16xbf16>, vector<16x16xbf16>, vector<32x16xf32> -> vector<32x16xf32>
    %c0_66 = arith.constant 0 : index
    %c0_67 = arith.constant 0 : index
    %c0_68 = arith.constant 0 : index
    %84 = vector.load %arg6[%c0_66, %c0_67, %c0_68] : memref<1x32x16xf32, #tpu.memory_space<vmem>>, vector<1x32x16xf32>
    %85 = vector.shape_cast %84 : vector<1x32x16xf32> to vector<32x16xf32>
    %86 = vector.shape_cast %83 : vector<32x16xf32> to vector<1x32x16xf32>
    tpu.vector_store %arg6[%c0_66, %c0_67, %c0_68], %86 {strides = array<i32>} : memref<1x32x16xf32, #tpu.memory_space<vmem>>, vector<1x32x16xf32>,
    return
  }
  func.func @transform_0(%arg0: i32) -> (i32, i32, i32) {
    %c0_i32 = arith.constant 0 : i32
    %c0_i32_0 = arith.constant 0 : i32
    %c0_i32_1 = arith.constant 0 : i32
    return %arg0, %c0_i32, %c0_i32_0 : i32, i32, i32
  }
  func.func @transform_1(%arg0: i32) -> (i32, i32, i32) {
    %c0_i32 = arith.constant 0 : i32
    %c0_i32_0 = arith.constant 0 : i32
    %c0_i32_1 = arith.constant 0 : i32
    %c0_i32_2 = arith.constant 0 : i32
    return %c0_i32, %c0_i32_0, %c0_i32_1 : i32, i32, i32
  }
  func.func @transform_2(%arg0: i32) -> (i32, i32) {
    %c0_i32 = arith.constant 0 : i32
    %c0_i32_0 = arith.constant 0 : i32
    %c0_i32_1 = arith.constant 0 : i32
    return %c0_i32, %c0_i32_0 : i32, i32
  }
  func.func @transform_3(%arg0: i32) -> i32 {
    %c0_i32 = arith.constant 0 : i32
    %c0_i32_0 = arith.constant 0 : i32
    return %c0_i32 : i32
  }
  func.func @transform_4(%arg0: i32) -> (i32, i32) {
    %c0_i32 = arith.constant 0 : i32
    %c0_i32_0 = arith.constant 0 : i32
    %c0_i32_1 = arith.constant 0 : i32
    return %c0_i32, %c0_i32_0 : i32, i32
  }
  func.func @transform_5(%arg0: i32) -> (i32, i32, i32) {
    %c0_i32 = arith.constant 0 : i32
    %c0_i32_0 = arith.constant 0 : i32
    %c0_i32_1 = arith.constant 0 : i32
    return %arg0, %c0_i32, %c0_i32_0 : i32, i32, i32
  }
}

</mosaic_0001>

<llo_original>
// kernel: tpu_custom_call.1
$region0: #{tpu_custom_call.1}
  #allocation0 [shape = 'u32[]', space=smem, size = 0x4, offset = 0x4, fixed_abs, tag = 'smem constant byte address 0x4 - core index']
  #allocation1 [shape = 'u32[144,128]{1,0:T(1,128)}', space=vmem, size = 0x12000, scoped, tag = 'internal scratch']
  #allocation2 [shape = 'f32[48,16]{1,0:T(8,128)}', space=vmem, size = 0x6000, scoped, tag = 'scratch operand']
  %s0 = inlined_call_operand.hbm [shape: bf16[2,32,16], index: 0, kind: input, shape index: {}]
  %s1 = inlined_call_operand.hbm [shape: bf16[4,48,16], index: 1, kind: input, shape index: {}]
  %s2 = inlined_call_operand.hbm [shape: f32[4,16], index: 2, kind: input, shape index: {}]
  %s3 = inlined_call_operand.hbm [shape: f32[4], index: 3, kind: input, shape index: {}]
  %s4 = inlined_call_operand.hbm [shape: bf16[16,16], index: 4, kind: input, shape index: {}]
  %s5 = inlined_call_operand.hbm [shape: f32[2,32,16], index: 5, kind: output, shape index: {}]
  %s6 = sld [smem:[#allocation0]]
  $region73: #{tpu_custom_call.1} parent=0
    _
  %s8 = ssub.s32 1, %s6
  %s9 = scalar_select 0, %s8, %s6
  $region1: #{tpu_custom_call.1} parent=0
    #allocation3 [shape = 'u8[16384]{0}', space=vmem, size = 0x4000, scoped, tag = 'input window, operand 0']
    #allocation4 [shape = 's32[2]{0}', space=sflag, size = 0x8, scoped, tag = 'scoped memory for tpu_custom_call.1']
    #allocation5 [shape = 's32[2]{0}', space=sflag, size = 0x8, scoped, tag = 'scoped memory for tpu_custom_call.1']
    #allocation6 [shape = 's32[2]{0}', space=sflag, size = 0x8, scoped, tag = 'scoped memory for tpu_custom_call.1']
    #allocation7 [shape = 'u8[49152]{0}', space=vmem, size = 0xc000, scoped, tag = 'input window, operand 1, single buffered']
    #allocation8 [shape = 's32[1]{0}', space=sflag, size = 0x4, scoped, tag = 'scoped memory for tpu_custom_call.1']
    #allocation9 [shape = 'u8[2048]{0}', space=vmem, size = 0x800, scoped, tag = 'input window, operand 2, single buffered']
    #allocation10 [shape = 'u8[512]{0}', space=smem, size = 0x200, scoped, tag = 'input window, operand 3, single buffered']
    #allocation11 [shape = 'u8[4096]{0}', space=vmem, size = 0x1000, scoped, tag = 'input window, operand 4, single buffered']
    #allocation12 [shape = 's32[1]{0}', space=sflag, size = 0x4, scoped, tag = 'scoped memory for tpu_custom_call.1']
    #allocation13 [shape = 'u8[32768]{0}', space=vmem, size = 0x8000, scoped, tag = 'output window, operand 0']
    %10 = vsyncpa [#allocation4], 0
    %s11 = scalar_lea.sflag [#allocation4], 1
    %12 = vsyncpa %s11, 0
    %13 = vsyncpa [#allocation8], 0
    %14 = vsyncpa [#allocation6], 0
    %15 = vsyncpa [#allocation12], 0
    %16 = vsyncpa [#allocation5], 0
    %s17 = scalar_lea.sflag [#allocation5], 1
    %18 = vsyncpa %s17, 0
    loop: start=0, step=1, limit=4
    $region2: #{tpu_custom_call.1} parent=1 // loop_pre_header
      _
    $region3: #{tpu_custom_call.1} parent=1 // loop_header
      %s20 = sphi 0, %s24
      %p21 = scmp.ge.s32.totalorder %s20, 4
      %s30 = sphi 0, %s32
      %s33 = sphi 0, %s30
      %s34 = sphi 0, %s33
      %s50 = sphi 0, %s34
      %s54 = sphi 0, %s54
      %s56 = sphi 0, %s54
      %s57 = sphi 0, %s56
      %s71 = sphi 0, %s57
      %s75 = sphi 0, %s75
      %s77 = sphi 0, %s75
      %s78 = sphi 0, %s77
      %s92 = sphi 0, %s78
      %s96 = sphi 0, %s96
      %s98 = sphi 0, %s96
      %s99 = sphi 0, %s98
      %s113 = sphi 0, %s99
      %s117 = sphi 0, %s117
      %s119 = sphi 0, %s117
      %s120 = sphi 0, %s119
      %s134 = sphi 0, %s120
      %s140 = sphi 0, %s142
      %s143 = sphi 0, %s140
      %s144 = sphi 0, %s143
      %s160 = sphi 0, %s144
    $region4: #{tpu_custom_call.1} parent=1 // loop_header_branch
      %23 = sbr.rel (%p21) target = $region8
    $region5: #{tpu_custom_call.1} parent=1 // loop_body
      %s25 = ssub.s32 %s20, 1
      %s26 = ssub.s32 %s20, 2
      %s27 = sadd.s32 %s20, 1
      %s28 = ssub.s32 %s20, %s27
      %p29 = scmp.eq.s32.totalorder %s28, 0
      %s31 = sadd.s32 %s30, 1
      %s32 = scalar_select %p29, %s30, %s31
      %p35 = pneg %p29
      %p36 = scmp.eq.s32.totalorder %s20, 1
      %p37 = por %p35, %p36
      %p38 = scmp.ne.s32.totalorder %s30, %s33
      %p39 = scmp.eq.s32.totalorder %s20, 0
      %p40 = por %p38, %p39
      %p41 = scmp.ne.s32.totalorder %s30, %s33
      %p42 = scmp.eq.s32.totalorder %s25, 1
      %p43 = por %p41, %p42
      %p44 = scmp.ne.s32.totalorder %s33, %s34
      %p45 = scmp.eq.s32.totalorder %s25, 0
      %p46 = por %p44, %p45
      %p47 = scmp.ne.s32.totalorder %s33, %s34
      %p48 = scmp.eq.s32.totalorder %s26, 1
      %p49 = por %p47, %p48
      %p51 = scmp.ne.s32.totalorder %s34, %s50
      %p52 = scmp.eq.s32.totalorder %s26, 0
      %p53 = por %p51, %p52
      %s55 = sadd.s32 %s54, 1
      %p58 = scmp.eq.s32.totalorder %s20, 1
      %p59 = scmp.ne.s32.totalorder %s54, %s56
      %p60 = scmp.eq.s32.totalorder %s20, 0
      %p61 = por %p59, %p60
      %p62 = scmp.ne.s32.totalorder %s54, %s56
      %p63 = scmp.eq.s32.totalorder %s25, 1
      %p64 = por %p62, %p63
      %p65 = scmp.ne.s32.totalorder %s56, %s57
      %p66 = scmp.eq.s32.totalorder %s25, 0
      %p67 = por %p65, %p66
      %p68 = scmp.ne.s32.totalorder %s56, %s57
      %p69 = scmp.eq.s32.totalorder %s26, 1
      %p70 = por %p68, %p69
      %p72 = scmp.ne.s32.totalorder %s57, %s71
      %p73 = scmp.eq.s32.totalorder %s26, 0
      %p74 = por %p72, %p73
      %s76 = sadd.s32 %s75, 1
      %p79 = scmp.eq.s32.totalorder %s20, 1
      %p80 = scmp.ne.s32.totalorder %s75, %s77
      %p81 = scmp.eq.s32.totalorder %s20, 0
      %p82 = por %p80, %p81
      %p83 = scmp.ne.s32.totalorder %s75, %s77
      %p84 = scmp.eq.s32.totalorder %s25, 1
      %p85 = por %p83, %p84
      %p86 = scmp.ne.s32.totalorder %s77, %s78
      %p87 = scmp.eq.s32.totalorder %s25, 0
      %p88 = por %p86, %p87
      %p89 = scmp.ne.s32.totalorder %s77, %s78
      %p90 = scmp.eq.s32.totalorder %s26, 1
      %p91 = por %p89, %p90
      %p93 = scmp.ne.s32.totalorder %s78, %s92
      %p94 = scmp.eq.s32.totalorder %s26, 0
      %p95 = por %p93, %p94
      %s97 = sadd.s32 %s96, 1
      %p100 = scmp.eq.s32.totalorder %s20, 1
      %p101 = scmp.ne.s32.totalorder %s96, %s98
      %p102 = scmp.eq.s32.totalorder %s20, 0
      %p103 = por %p101, %p102
      %p104 = scmp.ne.s32.totalorder %s96, %s98
      %p105 = scmp.eq.s32.totalorder %s25, 1
      %p106 = por %p104, %p105
      %p107 = scmp.ne.s32.totalorder %s98, %s99
      %p108 = scmp.eq.s32.totalorder %s25, 0
      %p109 = por %p107, %p108
      %p110 = scmp.ne.s32.totalorder %s98, %s99
      %p111 = scmp.eq.s32.totalorder %s26, 1
      %p112 = por %p110, %p111
      %p114 = scmp.ne.s32.totalorder %s99, %s113
      %p115 = scmp.eq.s32.totalorder %s26, 0
      %p116 = por %p114, %p115
      %s118 = sadd.s32 %s117, 1
      %p121 = scmp.eq.s32.totalorder %s20, 1
      %p122 = scmp.ne.s32.totalorder %s117, %s119
      %p123 = scmp.eq.s32.totalorder %s20, 0
      %p124 = por %p122, %p123
      %p125 = scmp.ne.s32.totalorder %s117, %s119
      %p126 = scmp.eq.s32.totalorder %s25, 1
      %p127 = por %p125, %p126
      %p128 = scmp.ne.s32.totalorder %s119, %s120
      %p129 = scmp.eq.s32.totalorder %s25, 0
      %p130 = por %p128, %p129
      %p131 = scmp.ne.s32.totalorder %s119, %s120
      %p132 = scmp.eq.s32.totalorder %s26, 1
      %p133 = por %p131, %p132
      %p135 = scmp.ne.s32.totalorder %s120, %s134
      %p136 = scmp.eq.s32.totalorder %s26, 0
      %p137 = por %p135, %p136
      %s138 = ssub.s32 %s20, %s27
      %p139 = scmp.eq.s32.totalorder %s138, 0
      %s141 = sadd.s32 %s140, 1
      %s142 = scalar_select %p139, %s140, %s141
      %p145 = pneg %p139
      %p146 = scmp.eq.s32.totalorder %s20, 1
      %p147 = por %p145, %p146
      %p148 = scmp.ne.s32.totalorder %s140, %s143
      %p149 = scmp.eq.s32.totalorder %s20, 0
      %p150 = por %p148, %p149
      %p151 = scmp.ne.s32.totalorder %s140, %s143
      %p152 = scmp.eq.s32.totalorder %s25, 1
      %p153 = por %p151, %p152
      %p154 = scmp.ne.s32.totalorder %s143, %s144
      %p155 = scmp.eq.s32.totalorder %s25, 0
      %p156 = por %p154, %p155
      %p157 = scmp.ne.s32.totalorder %s143, %s144
      %p158 = scmp.eq.s32.totalorder %s26, 1
      %p159 = por %p157, %p158
      %p161 = scmp.ne.s32.totalorder %s144, %s160
      %p162 = scmp.eq.s32.totalorder %s26, 0
      %p163 = por %p161, %p162
      %p164 = scmp.le.s32.totalorder 1, %s20
      %p165 = scmp.lt.s32.totalorder %s20, 3
      %p166 = pnand %p164, %p165
      %p167 = pneg %p166
      // Predicated region
      $region9: #{tpu_custom_call.1} parent=5 // pred_check
        _
      $region10: #{tpu_custom_call.1} parent=5 // pred_check_branch
        %169 = sbr.rel (%p166) target = $region12
      $region11: #{tpu_custom_call.1} parent=5 // pred_region
        %s170 = ssub.s32 %s20, 1
        // Predicated region
        $region13: #{tpu_custom_call.1} parent=11 // pred_check
          %p171 = pneg %p67
        $region14: #{tpu_custom_call.1} parent=11 // pred_check_branch
          %173 = sbr.rel (%p171) target = $region16
        $region15: #{tpu_custom_call.1} parent=11 // pred_region
          %s175 = ssub.s32 1536, 1536
          %176 = vsyncadd [#allocation8], %s175
          %s177 = sshll.u32 [#allocation7], 4
          %s178 = int_to_ptr.vmem [resolvable:$true] %s177
          %183 = dma.hbm_to_vmem [thread:$0]  %s1, 1536, %s178, [#allocation8], 64, 64, 4
        $region16: #{tpu_custom_call.1} parent=11 // pred_fallthru
          _
        // Predicated region
        $region17: #{tpu_custom_call.1} parent=11 // pred_check
          %p184 = pneg %p88
        $region18: #{tpu_custom_call.1} parent=11 // pred_check_branch
          %186 = sbr.rel (%p184) target = $region20
        $region19: #{tpu_custom_call.1} parent=11 // pred_region
          %s188 = ssub.s32 64, 64
          %189 = vsyncadd [#allocation8], %s188
          %s191 = sshll.u32 [#allocation9], 4
          %s192 = int_to_ptr.vmem [resolvable:$true] %s191
          %194 = dma.hbm_to_vmem [thread:$0]  %s2, 64, %s192, [#allocation8]
        $region20: #{tpu_custom_call.1} parent=11 // pred_fallthru
          _
        // Predicated region
        $region21: #{tpu_custom_call.1} parent=11 // pred_check
          %p195 = pneg %p109
        $region22: #{tpu_custom_call.1} parent=11 // pred_check_branch
          %197 = sbr.rel (%p195) target = $region24
        $region23: #{tpu_custom_call.1} parent=11 // pred_region
          %s199 = ssub.s32 16, 16
          %200 = vsyncadd [#allocation6], %s199
          %203 = dma.hbm_to_smem %s3, 16, [#allocation10], [#allocation6]
        $region24: #{tpu_custom_call.1} parent=11 // pred_fallthru
          _
        // Predicated region
        $region25: #{tpu_custom_call.1} parent=11 // pred_check
          %p204 = pneg %p130
        $region26: #{tpu_custom_call.1} parent=11 // pred_check_branch
          %206 = sbr.rel (%p204) target = $region28
        $region27: #{tpu_custom_call.1} parent=11 // pred_region
          %s208 = ssub.s32 128, 128
          %209 = vsyncadd [#allocation12], %s208
          %s210 = sshll.u32 [#allocation11], 4
          %s211 = int_to_ptr.vmem [resolvable:$true] %s210
          %216 = dma.hbm_to_vmem [thread:$0]  %s4, 128, %s211, [#allocation12], 64, 64, 4
        $region28: #{tpu_custom_call.1} parent=11 // pred_fallthru
          _
      $region12: #{tpu_custom_call.1} parent=5 // pred_fallthru
        _
      %p217 = scmp.lt.s32.totalorder %s20, 2
      // Predicated region
      $region29: #{tpu_custom_call.1} parent=5 // pred_check
        %p218 = pneg %p217
      $region30: #{tpu_custom_call.1} parent=5 // pred_check_branch
        %220 = sbr.rel (%p218) target = $region32
      $region31: #{tpu_custom_call.1} parent=5 // pred_region
        // Predicated region
        $region33: #{tpu_custom_call.1} parent=31 // pred_check
          %p221 = pneg %p40
        $region34: #{tpu_custom_call.1} parent=31 // pred_check_branch
          %223 = sbr.rel (%p221) target = $region36
        $region35: #{tpu_custom_call.1} parent=31 // pred_region
          %s224 = sand.u32 %s30, 1
          %s225 = scalar_lea.sflag [#allocation4], %s224
          %s226 = sand.u32 %s30, 1
          %s227 = smul.addr %s226, 16
          %s228 = scalar_lea.vmem [#allocation3], %s227
          %s230 = ssub.s32 256, 256
          %231 = vsyncadd %s225, %s230
          %s232 = smul.addr %s20, 4
          %s233 = smul.addr %s232, 64
          %s234 = scalar_lea.hbm %s0, %s233
          %s235 = sshll.u32 %s228, 4
          %s236 = int_to_ptr.vmem [resolvable:$true] %s235
          %241 = dma.hbm_to_vmem [thread:$0]  %s234, 256, %s236, %s225, 64, 64, 4
        $region36: #{tpu_custom_call.1} parent=31 // pred_fallthru
          _
      $region32: #{tpu_custom_call.1} parent=5 // pred_fallthru
        _
      %p242 = scmp.le.s32.totalorder 1, %s20
      %p243 = scmp.lt.s32.totalorder %s20, 3
      %p244 = pnand %p242, %p243
      %p245 = pneg %p244
      // Predicated region
      $region37: #{tpu_custom_call.1} parent=5 // pred_check
        _
      $region38: #{tpu_custom_call.1} parent=5 // pred_check_branch
        %247 = sbr.rel (%p244) target = $region40
      $region39: #{tpu_custom_call.1} parent=5 // pred_region
        %s248 = ssub.s32 %s20, 1
        %s249 = sand.u32 %s33, 1
        %s250 = scalar_lea.sflag [#allocation4], %s249
        %s251 = sand.u32 %s33, 1
        %s252 = smul.addr %s251, 16
        %s253 = scalar_lea.vmem [#allocation3], %s252
        // Predicated region
        $region41: #{tpu_custom_call.1} parent=39 // pred_check
          %p254 = pneg %p46
        $region42: #{tpu_custom_call.1} parent=39 // pred_check_branch
          %256 = sbr.rel (%p254) target = $region44
        $region43: #{tpu_custom_call.1} parent=39 // pred_region
          %257 = dma.done %s250, 256
        $region44: #{tpu_custom_call.1} parent=39 // pred_fallthru
          _
        // Predicated region
        $region45: #{tpu_custom_call.1} parent=39 // pred_check
          %p258 = pneg %p67
        $region46: #{tpu_custom_call.1} parent=39 // pred_check_branch
          %260 = sbr.rel (%p258) target = $region48
        $region47: #{tpu_custom_call.1} parent=39 // pred_region
          %261 = dma.done [#allocation8], 1536
        $region48: #{tpu_custom_call.1} parent=39 // pred_fallthru
          _
        // Predicated region
        $region49: #{tpu_custom_call.1} parent=39 // pred_check
          %p262 = pneg %p88
        $region50: #{tpu_custom_call.1} parent=39 // pred_check_branch
          %264 = sbr.rel (%p262) target = $region52
        $region51: #{tpu_custom_call.1} parent=39 // pred_region
          %265 = dma.done [#allocation8], 64
        $region52: #{tpu_custom_call.1} parent=39 // pred_fallthru
          _
        // Predicated region
        $region53: #{tpu_custom_call.1} parent=39 // pred_check
          %p266 = pneg %p109
        $region54: #{tpu_custom_call.1} parent=39 // pred_check_branch
          %268 = sbr.rel (%p266) target = $region56
        $region55: #{tpu_custom_call.1} parent=39 // pred_region
          %269 = dma.done [#allocation6], 16
        $region56: #{tpu_custom_call.1} parent=39 // pred_fallthru
          _
        // Predicated region
        $region57: #{tpu_custom_call.1} parent=39 // pred_check
          %p270 = pneg %p130
        $region58: #{tpu_custom_call.1} parent=39 // pred_check_branch
          %272 = sbr.rel (%p270) target = $region60
        $region59: #{tpu_custom_call.1} parent=39 // pred_region
          %273 = dma.done [#allocation12], 128
        $region60: #{tpu_custom_call.1} parent=39 // pred_fallthru
          _
        %274 = sfence
        %s275 = sand.u32 %s33, 1
        %s276 = scalar_lea.sflag [#allocation4], %s275
        %s277 = sand.u32 %s33, 1
        %s278 = smul.addr %s277, 16
        %s279 = scalar_lea.vmem [#allocation3], %s278
        %p280 = pneg %p46
        %p281 = pneg %p43
        %p282 = pneg %p67
        %p283 = pneg %p64
        %p284 = pneg %p88
        %p285 = pneg %p85
        %p286 = pneg %p109
        %p287 = pneg %p106
        %p288 = pneg %p130
        %p289 = pneg %p127
        %p290 = pneg %p156
        %p291 = pneg %p153
        %s292 = sand.u32 %s143, 1
        %s293 = scalar_lea.sflag [#allocation5], %s292
        %s294 = sand.u32 %s143, 1
        %s295 = smul.addr %s294, 32
        %s296 = scalar_lea.vmem [#allocation13], %s295
        %vm298 = vcmask 130048
        %299 = vst.msk [vmem:[#allocation2] sm:$0xff] %vm298, 0.0
        %300 = vst.msk [vmem:[#allocation2 + $0x28] sm:$0xff] %vm298, 0.0
        %v301 = vld [vmem:[%s253] sm:$0xf]
        %v302 = vld [vmem:[%s253 + $0x4] sm:$0xf]
        %v303 = vld [vmem:[%s253 + $0x8] sm:$0xf]
        %v304 = vld [vmem:[%s253 + $0xc] sm:$0xf]
        %v305 = vunpack.c.l.bf16 %v301
        %v306 = vunpack.c.l.bf16 %v302
        %v307 = vunpack.c.l.bf16 %v303
        %v308 = vunpack.c.l.bf16 %v304
        %309 = vst.msk [vmem:[#allocation2 + $0x8] sm:$0xff] %vm298, %v305
        %310 = vst.msk [vmem:[#allocation2 + $0x10] sm:$0xff] %vm298, %v306
        %311 = vst.msk [vmem:[#allocation2 + $0x18] sm:$0xff] %vm298, %v307
        %312 = vst.msk [vmem:[#allocation2 + $0x20] sm:$0xff] %vm298, %v308
        %v313 = vld [vmem:[#allocation2 + $0x10] sm:$0xff]
        %v314 = vld [vmem:[#allocation2 + $0x18] sm:$0xff]
        %v315 = vld [vmem:[#allocation2 + $0x20] sm:$0xff]
        %v316 = vld [vmem:[#allocation2 + $0x28] sm:$0xff]
        %v317 = vld [vmem:[#allocation2 + $0x8] sm:$0xff]
        %v318 = vld [vmem:[#allocation2] sm:$0xff]
        %323 = vrot.lane.b32.xlu0 %v317, 16
        %v324 = vpop.permute.xlu0 %323
        %325 = vrot.lane.b32.xlu0 %v313, 16
        %v326 = vpop.permute.xlu0 %325
        %327 = vrot.lane.b32.xlu0 %v314, 16
        %v328 = vpop.permute.xlu0 %327
        %329 = vrot.lane.b32.xlu0 %v315, 16
        %v330 = vpop.permute.xlu0 %329
        %336 = vrot.lane.b32.xlu0 %v318, 32
        %v337 = vpop.permute.xlu0 %336
        %338 = vrot.lane.b32.xlu0 %v317, 32
        %v339 = vpop.permute.xlu0 %338
        %340 = vrot.lane.b32.xlu0 %v313, 32
        %v341 = vpop.permute.xlu0 %340
        %342 = vrot.lane.b32.xlu0 %v314, 32
        %v343 = vpop.permute.xlu0 %342
        %v348 = vsel %vm298, %v313, %v324
        %v349 = vsel %vm298, %v314, %v326
        %v350 = vsel %vm298, %v315, %v328
        %v351 = vsel %vm298, %v316, %v330
        %vm352 = vcmask 261120
        %v353 = vsel %vm352, %v348, %v337
        %v354 = vsel %vm352, %v349, %v339
        %v355 = vsel %vm352, %v350, %v341
        %v356 = vsel %vm352, %v351, %v343
        %v357 = vpack.c.bf16 %v354, %v353
        %v358 = vpack.c.bf16 %v356, %v355
        %v359 = vld [vmem:[#allocation7] sm:$0xf]
        %v360 = vld [vmem:[#allocation7 + $0x4] sm:$0xf]
        %v361 = vld [vmem:[#allocation7 + $0x8] sm:$0xf]
        %v362 = vld [vmem:[#allocation7 + $0xc] sm:$0xf]
        %v363 = vld [vmem:[#allocation7 + $0x10] sm:$0xf]
        %v364 = vld [vmem:[#allocation7 + $0x14] sm:$0xf]
        %v365 = vld [vmem:[#allocation9] sm:$0x1]
        %v366 = vlaneseq
        %v367 = vshrl.u32 %v366, 7
        %v368 = vsub.s32 0, %v367
        %v369 = vrot.slane %v365, %v368
        %v376 = vunpack.c.l.b16 %v359
        %v377 = vunpack.c.l.b16 %v360
        %v378 = vunpack.c.l.b16 %v361
        %v379 = vunpack.c.l.b16 %v362
        %v380 = vunpack.c.l.b16 %v363
        %v381 = vunpack.c.l.b16 %v364
        %v382 = vpack.c.b16 %v377, %v376
        %v383 = vpack.c.b16 %v379, %v378
        %v384 = vpack.c.b16 %v381, %v380
        %vm388 = vcmask 392192
        %v390 = vsel %vm388, %v357, 0
        %v393 = vsel %vm388, %v358, 0
        %395 = vmatprep.subr.bf16.mxu0 0
        %396 = vmatpush1.bf16.msra.mxu0 %v382
        %397 = vmatprep.subr.bf16.mxu0 0
        %398 = vmatpush1.bf16.msra.mxu0 %v383
        %399 = vmatprep.subr.bf16.mxu0 0
        %400 = vmatpush1.bf16.msra.mxu0 %v384
        %401 = vmatprep.subr.bf16.mxu0 0
        %402 = vmatpush1.bf16.msra.mxu0 0
        %403 = vmatprep.subr.bf16.mxu0 0
        %404 = vmatpush1.bf16.msra.mxu0 0
        %405 = vmatprep.subr.bf16.mxu0 0
        %406 = vmatpush1.bf16.msra.mxu0 0
        %407 = vmatprep.subr.bf16.mxu0 0
        %408 = vmatpush1.bf16.msra.mxu0 0
        %409 = vmatprep.subr.bf16.mxu0 0
        %410 = vmatpush1.bf16.msra.mxu0 0
        %411 = vmatprep.subr.bf16.mxu0 0
        %412 = vmatpush1.bf16.msra.mxu0 0
        %413 = vmatprep.subr.bf16.mxu0 0
        %414 = vmatpush1.bf16.msra.mxu0 0
        %415 = vmatprep.subr.bf16.mxu0 0
        %416 = vmatpush1.bf16.msra.mxu0 0
        %417 = vmatprep.subr.bf16.mxu0 0
        %418 = vmatpush1.bf16.msra.mxu0 0
        %419 = vmatprep.subr.bf16.mxu0 0
        %420 = vmatpush1.bf16.msra.mxu0 0
        %421 = vmatprep.subr.bf16.mxu0 0
        %422 = vmatpush1.bf16.msra.mxu0 0
        %423 = vmatprep.subr.bf16.mxu0 0
        %424 = vmatpush1.bf16.msra.mxu0 0
        %425 = vmatprep.subr.bf16.mxu0 0
        %426 = vmatpush1.bf16.msra.mxu0 0
        %427 = vmatprep.mubr.bf16.mxu0 0
        %428 = vmatmul.mubr.bf16.gmra.mrb[0].mxu0 %v390
        %v429 = vpop.f32.mrb[0].mxu0
        %v430 = vadd.f32 %v369, %v429
        %v431 = vpop.f32.mrb[0].mxu0
        %v432 = vpop.f32.mrb[0].mxu0
        %v433 = vadd.f32 %v369, %v432
        %v434 = vpop.f32.mrb[0].mxu0
        %435 = vmatprep.mubr.bf16.mxu0 0
        %436 = vmatmul.mubr.bf16.gmra.mrb[0].mxu0 %v393
        %v437 = vpop.f32.mrb[0].mxu0
        %v438 = vadd.f32 %v369, %v437
        %v439 = vpop.f32.mrb[0].mxu0
        %v440 = vpop.f32.mrb[0].mxu0
        %v441 = vadd.f32 %v369, %v440
        %v442 = vpop.f32.mrb[0].mxu0
        %443 = vdwg.mxu0
        %s444 = sld [smem:[#allocation10]]
        %vm445 = vcmp.gt.f32.partialorder %v430, 0.0
        %vm446 = vcmp.gt.f32.partialorder %v433, 0.0
        %vm447 = vcmp.gt.f32.partialorder %v438, 0.0
        %vm448 = vcmp.gt.f32.partialorder %v441, 0.0
        %v449 = vstv %s444
        %v450 = vmul.f32 %v449, %v430
        %v451 = vmul.f32 %v449, %v433
        %v452 = vmul.f32 %v449, %v438
        %v453 = vmul.f32 %v449, %v441
        %v454 = vsel %vm445, %v430, %v450
        %v455 = vsel %vm446, %v433, %v451
        %v456 = vsel %vm447, %v438, %v452
        %v457 = vsel %vm448, %v441, %v453
        %458 = vst.msk [vmem:[#allocation2 + $0x8] sm:$0xff] %vm298, %v454
        %459 = vst.msk [vmem:[#allocation2 + $0x10] sm:$0xff] %vm298, %v455
        %460 = vst.msk [vmem:[#allocation2 + $0x18] sm:$0xff] %vm298, %v456
        %461 = vst.msk [vmem:[#allocation2 + $0x20] sm:$0xff] %vm298, %v457
        %v462 = vld [vmem:[#allocation2 + $0xc] sm:$0xff]
        %v463 = vld [vmem:[#allocation2 + $0x14] sm:$0xff]
        %v464 = vld [vmem:[#allocation2 + $0x1c] sm:$0xff]
        %v465 = vld [vmem:[#allocation2 + $0x24] sm:$0xff]
        %v466 = vld [vmem:[#allocation2 + $0x8] sm:$0xff]
        %v467 = vld [vmem:[#allocation2 + $0x10] sm:$0xff]
        %v468 = vld [vmem:[#allocation2 + $0x18] sm:$0xff]
        %v469 = vld [vmem:[#allocation2 + $0x20] sm:$0xff]
        %v470 = vld [vmem:[#allocation2 + $0x4] sm:$0xff]
        %475 = vrot.lane.b32.xlu0 %v466, 16
        %v476 = vpop.permute.xlu0 %475
        %477 = vrot.lane.b32.xlu0 %v467, 16
        %v478 = vpop.permute.xlu0 %477
        %479 = vrot.lane.b32.xlu0 %v468, 16
        %v480 = vpop.permute.xlu0 %479
        %481 = vrot.lane.b32.xlu0 %v469, 16
        %v482 = vpop.permute.xlu0 %481
        %491 = vrot.lane.b32.xlu0 %v470, 32
        %v492 = vpop.permute.xlu0 %491
        %493 = vrot.lane.b32.xlu0 %v462, 32
        %v494 = vpop.permute.xlu0 %493
        %495 = vrot.lane.b32.xlu0 %v463, 32
        %v496 = vpop.permute.xlu0 %495
        %497 = vrot.lane.b32.xlu0 %v464, 32
        %v498 = vpop.permute.xlu0 %497
        %v503 = vsel %vm298, %v462, %v476
        %v504 = vsel %vm298, %v463, %v478
        %v505 = vsel %vm298, %v464, %v480
        %v506 = vsel %vm298, %v465, %v482
        %v507 = vsel %vm352, %v503, %v492
        %v508 = vsel %vm352, %v504, %v494
        %v509 = vsel %vm352, %v505, %v496
        %v510 = vsel %vm352, %v506, %v498
        %v511 = vpack.c.bf16 %v508, %v507
        %v512 = vpack.c.bf16 %v510, %v509
        %s513 = scalar_lea.vmem [#allocation7], 24
        %v514 = vld [vmem:[%s513] sm:$0xf]
        %v515 = vld [vmem:[%s513 + $0x4] sm:$0xf]
        %v516 = vld [vmem:[%s513 + $0x8] sm:$0xf]
        %v517 = vld [vmem:[%s513 + $0xc] sm:$0xf]
        %v518 = vld [vmem:[%s513 + $0x10] sm:$0xf]
        %v519 = vld [vmem:[%s513 + $0x14] sm:$0xf]
        %v520 = vld [vmem:[#allocation9 + $0x1] sm:$0x1]
        %v521 = vlaneseq
        %v522 = vshrl.u32 %v521, 7
        %v523 = vsub.s32 0, %v522
        %v524 = vrot.slane %v520, %v523
        %v531 = vunpack.c.l.b16 %v514
        %v532 = vunpack.c.l.b16 %v515
        %v533 = vunpack.c.l.b16 %v516
        %v534 = vunpack.c.l.b16 %v517
        %v535 = vunpack.c.l.b16 %v518
        %v536 = vunpack.c.l.b16 %v519
        %v537 = vpack.c.b16 %v532, %v531
        %v538 = vpack.c.b16 %v534, %v533
        %v539 = vpack.c.b16 %v536, %v535
        %v544 = vsel %vm388, %v511, 0
        %v547 = vsel %vm388, %v512, 0
        %549 = vmatprep.subr.bf16.mxu0 0
        %550 = vmatpush1.bf16.msra.mxu0 %v537
        %551 = vmatprep.subr.bf16.mxu0 0
        %552 = vmatpush1.bf16.msra.mxu0 %v538
        %553 = vmatprep.subr.bf16.mxu0 0
        %554 = vmatpush1.bf16.msra.mxu0 %v539
        %555 = vmatprep.subr.bf16.mxu0 0
        %556 = vmatpush1.bf16.msra.mxu0 0
        %557 = vmatprep.subr.bf16.mxu0 0
        %558 = vmatpush1.bf16.msra.mxu0 0
        %559 = vmatprep.subr.bf16.mxu0 0
        %560 = vmatpush1.bf16.msra.mxu0 0
        %561 = vmatprep.subr.bf16.mxu0 0
        %562 = vmatpush1.bf16.msra.mxu0 0
        %563 = vmatprep.subr.bf16.mxu0 0
        %564 = vmatpush1.bf16.msra.mxu0 0
        %565 = vmatprep.subr.bf16.mxu0 0
        %566 = vmatpush1.bf16.msra.mxu0 0
        %567 = vmatprep.subr.bf16.mxu0 0
        %568 = vmatpush1.bf16.msra.mxu0 0
        %569 = vmatprep.subr.bf16.mxu0 0
        %570 = vmatpush1.bf16.msra.mxu0 0
        %571 = vmatprep.subr.bf16.mxu0 0
        %572 = vmatpush1.bf16.msra.mxu0 0
        %573 = vmatprep.subr.bf16.mxu0 0
        %574 = vmatpush1.bf16.msra.mxu0 0
        %575 = vmatprep.subr.bf16.mxu0 0
        %576 = vmatpush1.bf16.msra.mxu0 0
        %577 = vmatprep.subr.bf16.mxu0 0
        %578 = vmatpush1.bf16.msra.mxu0 0
        %579 = vmatprep.subr.bf16.mxu0 0
        %580 = vmatpush1.bf16.msra.mxu0 0
        %581 = vmatprep.mubr.bf16.mxu0 0
        %582 = vmatmul.mubr.bf16.gmra.mrb[0].mxu0 %v544
        %v583 = vpop.f32.mrb[0].mxu0
        %v584 = vadd.f32 %v524, %v583
        %v585 = vpop.f32.mrb[0].mxu0
        %v586 = vpop.f32.mrb[0].mxu0
        %v587 = vadd.f32 %v524, %v586
        %v588 = vpop.f32.mrb[0].mxu0
        %589 = vmatprep.mubr.bf16.mxu0 0
        %590 = vmatmul.mubr.bf16.gmra.mrb[0].mxu0 %v547
        %v591 = vpop.f32.mrb[0].mxu0
        %v592 = vadd.f32 %v524, %v591
        %v593 = vpop.f32.mrb[0].mxu0
        %v594 = vpop.f32.mrb[0].mxu0
        %v595 = vadd.f32 %v524, %v594
        %v596 = vpop.f32.mrb[0].mxu0
        %597 = vdwg.mxu0
        %s598 = sld [smem:[#allocation10 + $0x1]]
        %vm599 = vcmp.gt.f32.partialorder %v584, 0.0
        %vm600 = vcmp.gt.f32.partialorder %v587, 0.0
        %vm601 = vcmp.gt.f32.partialorder %v592, 0.0
        %vm602 = vcmp.gt.f32.partialorder %v595, 0.0
        %v603 = vstv %s598
        %v604 = vmul.f32 %v603, %v584
        %v605 = vmul.f32 %v603, %v587
        %v606 = vmul.f32 %v603, %v592
        %v607 = vmul.f32 %v603, %v595
        %v608 = vsel %vm599, %v584, %v604
        %v609 = vsel %vm600, %v587, %v605
        %v610 = vsel %vm601, %v592, %v606
        %v611 = vsel %vm602, %v595, %v607
        %612 = vst.msk [vmem:[#allocation2 + $0x8] sm:$0xff] %vm298, %v608
        %613 = vst.msk [vmem:[#allocation2 + $0x10] sm:$0xff] %vm298, %v609
        %614 = vst.msk [vmem:[#allocation2 + $0x18] sm:$0xff] %vm298, %v610
        %615 = vst.msk [vmem:[#allocation2 + $0x20] sm:$0xff] %vm298, %v611
        %v616 = vld [vmem:[#allocation2 + $0xa] sm:$0xff]
        %v617 = vld [vmem:[#allocation2 + $0x12] sm:$0xff]
        %v618 = vld [vmem:[#allocation2 + $0x1a] sm:$0xff]
        %v619 = vld [vmem:[#allocation2 + $0x22] sm:$0xff]
        %v620 = vld [vmem:[#allocation2 + $0x8] sm:$0xff]
        %v621 = vld [vmem:[#allocation2 + $0x10] sm:$0xff]
        %v622 = vld [vmem:[#allocation2 + $0x18] sm:$0xff]
        %v623 = vld [vmem:[#allocation2 + $0x20] sm:$0xff]
        %v624 = vld [vmem:[#allocation2 + $0x6] sm:$0xff]
        %v625 = vld [vmem:[#allocation2 + $0xe] sm:$0xff]
        %v626 = vld [vmem:[#allocation2 + $0x16] sm:$0xff]
        %v627 = vld [vmem:[#allocation2 + $0x1e] sm:$0xff]
        %632 = vrot.lane.b32.xlu0 %v620, 16
        %v633 = vpop.permute.xlu0 %632
        %634 = vrot.lane.b32.xlu0 %v621, 16
        %v635 = vpop.permute.xlu0 %634
        %636 = vrot.lane.b32.xlu0 %v622, 16
        %v637 = vpop.permute.xlu0 %636
        %638 = vrot.lane.b32.xlu0 %v623, 16
        %v639 = vpop.permute.xlu0 %638
        %648 = vrot.lane.b32.xlu0 %v624, 32
        %v649 = vpop.permute.xlu0 %648
        %650 = vrot.lane.b32.xlu0 %v625, 32
        %v651 = vpop.permute.xlu0 %650
        %652 = vrot.lane.b32.xlu0 %v626, 32
        %v653 = vpop.permute.xlu0 %652
        %654 = vrot.lane.b32.xlu0 %v627, 32
        %v655 = vpop.permute.xlu0 %654
        %v660 = vsel %vm298, %v616, %v633
        %v661 = vsel %vm298, %v617, %v635
        %v662 = vsel %vm298, %v618, %v637
        %v663 = vsel %vm298, %v619, %v639
        %v664 = vsel %vm352, %v660, %v649
        %v665 = vsel %vm352, %v661, %v651
        %v666 = vsel %vm352, %v662, %v653
        %v667 = vsel %vm352, %v663, %v655
        %v668 = vpack.c.bf16 %v665, %v664
        %v669 = vpack.c.bf16 %v667, %v666
        %s670 = scalar_lea.vmem [#allocation7], 48
        %v671 = vld [vmem:[%s670] sm:$0xf]
        %v672 = vld [vmem:[%s670 + $0x4] sm:$0xf]
        %v673 = vld [vmem:[%s670 + $0x8] sm:$0xf]
        %v674 = vld [vmem:[%s670 + $0xc] sm:$0xf]
        %v675 = vld [vmem:[%s670 + $0x10] sm:$0xf]
        %v676 = vld [vmem:[%s670 + $0x14] sm:$0xf]
        %v677 = vld [vmem:[#allocation9 + $0x2] sm:$0x1]
        %v678 = vlaneseq
        %v679 = vshrl.u32 %v678, 7
        %v680 = vsub.s32 0, %v679
        %v681 = vrot.slane %v677, %v680
        %v688 = vunpack.c.l.b16 %v671
        %v689 = vunpack.c.l.b16 %v672
        %v690 = vunpack.c.l.b16 %v673
        %v691 = vunpack.c.l.b16 %v674
        %v692 = vunpack.c.l.b16 %v675
        %v693 = vunpack.c.l.b16 %v676
        %v694 = vpack.c.b16 %v689, %v688
        %v695 = vpack.c.b16 %v691, %v690
        %v696 = vpack.c.b16 %v693, %v692
        %v701 = vsel %vm388, %v668, 0
        %v704 = vsel %vm388, %v669, 0
        %706 = vmatprep.subr.bf16.mxu0 0
        %707 = vmatpush1.bf16.msra.mxu0 %v694
        %708 = vmatprep.subr.bf16.mxu0 0
        %709 = vmatpush1.bf16.msra.mxu0 %v695
        %710 = vmatprep.subr.bf16.mxu0 0
        %711 = vmatpush1.bf16.msra.mxu0 %v696
        %712 = vmatprep.subr.bf16.mxu0 0
        %713 = vmatpush1.bf16.msra.mxu0 0
        %714 = vmatprep.subr.bf16.mxu0 0
        %715 = vmatpush1.bf16.msra.mxu0 0
        %716 = vmatprep.subr.bf16.mxu0 0
        %717 = vmatpush1.bf16.msra.mxu0 0
        %718 = vmatprep.subr.bf16.mxu0 0
        %719 = vmatpush1.bf16.msra.mxu0 0
        %720 = vmatprep.subr.bf16.mxu0 0
        %721 = vmatpush1.bf16.msra.mxu0 0
        %722 = vmatprep.subr.bf16.mxu0 0
        %723 = vmatpush1.bf16.msra.mxu0 0
        %724 = vmatprep.subr.bf16.mxu0 0
        %725 = vmatpush1.bf16.msra.mxu0 0
        %726 = vmatprep.subr.bf16.mxu0 0
        %727 = vmatpush1.bf16.msra.mxu0 0
        %728 = vmatprep.subr.bf16.mxu0 0
        %729 = vmatpush1.bf16.msra.mxu0 0
        %730 = vmatprep.subr.bf16.mxu0 0
        %731 = vmatpush1.bf16.msra.mxu0 0
        %732 = vmatprep.subr.bf16.mxu0 0
        %733 = vmatpush1.bf16.msra.mxu0 0
        %734 = vmatprep.subr.bf16.mxu0 0
        %735 = vmatpush1.bf16.msra.mxu0 0
        %736 = vmatprep.subr.bf16.mxu0 0
        %737 = vmatpush1.bf16.msra.mxu0 0
        %738 = vmatprep.mubr.bf16.mxu0 0
        %739 = vmatmul.mubr.bf16.gmra.mrb[0].mxu0 %v701
        %v740 = vpop.f32.mrb[0].mxu0
        %v741 = vadd.f32 %v681, %v740
        %v742 = vpop.f32.mrb[0].mxu0
        %v743 = vpop.f32.mrb[0].mxu0
        %v744 = vadd.f32 %v681, %v743
        %v745 = vpop.f32.mrb[0].mxu0
        %746 = vmatprep.mubr.bf16.mxu0 0
        %747 = vmatmul.mubr.bf16.gmra.mrb[0].mxu0 %v704
        %v748 = vpop.f32.mrb[0].mxu0
        %v749 = vadd.f32 %v681, %v748
        %v750 = vpop.f32.mrb[0].mxu0
        %v751 = vpop.f32.mrb[0].mxu0
        %v752 = vadd.f32 %v681, %v751
        %v753 = vpop.f32.mrb[0].mxu0
        %754 = vdwg.mxu0
        %s755 = sld [smem:[#allocation10 + $0x2]]
        %vm756 = vcmp.gt.f32.partialorder %v741, 0.0
        %vm757 = vcmp.gt.f32.partialorder %v744, 0.0
        %vm758 = vcmp.gt.f32.partialorder %v749, 0.0
        %vm759 = vcmp.gt.f32.partialorder %v752, 0.0
        %v760 = vstv %s755
        %v761 = vmul.f32 %v760, %v741
        %v762 = vmul.f32 %v760, %v744
        %v763 = vmul.f32 %v760, %v749
        %v764 = vmul.f32 %v760, %v752
        %v765 = vsel %vm756, %v741, %v761
        %v766 = vsel %vm757, %v744, %v762
        %v767 = vsel %vm758, %v749, %v763
        %v768 = vsel %vm759, %v752, %v764
        %769 = vst.msk [vmem:[#allocation2 + $0x8] sm:$0xff] %vm298, %v765
        %770 = vst.msk [vmem:[#allocation2 + $0x10] sm:$0xff] %vm298, %v766
        %771 = vst.msk [vmem:[#allocation2 + $0x18] sm:$0xff] %vm298, %v767
        %772 = vst.msk [vmem:[#allocation2 + $0x20] sm:$0xff] %vm298, %v768
        %v773 = vld [vmem:[#allocation2 + $0x9] sm:$0xff]
        %v774 = vld [vmem:[#allocation2 + $0x11] sm:$0xff]
        %v775 = vld [vmem:[#allocation2 + $0x19] sm:$0xff]
        %v776 = vld [vmem:[#allocation2 + $0x21] sm:$0xff]
        %v777 = vld [vmem:[#allocation2 + $0x8] sm:$0xff]
        %v778 = vld [vmem:[#allocation2 + $0x10] sm:$0xff]
        %v779 = vld [vmem:[#allocation2 + $0x18] sm:$0xff]
        %v780 = vld [vmem:[#allocation2 + $0x20] sm:$0xff]
        %v781 = vld [vmem:[#allocation2 + $0x7] sm:$0xff]
        %v782 = vld [vmem:[#allocation2 + $0xf] sm:$0xff]
        %v783 = vld [vmem:[#allocation2 + $0x17] sm:$0xff]
        %v784 = vld [vmem:[#allocation2 + $0x1f] sm:$0xff]
        %789 = vrot.lane.b32.xlu0 %v777, 16
        %v790 = vpop.permute.xlu0 %789
        %791 = vrot.lane.b32.xlu0 %v778, 16
        %v792 = vpop.permute.xlu0 %791
        %793 = vrot.lane.b32.xlu0 %v779, 16
        %v794 = vpop.permute.xlu0 %793
        %795 = vrot.lane.b32.xlu0 %v780, 16
        %v796 = vpop.permute.xlu0 %795
        %805 = vrot.lane.b32.xlu0 %v781, 32
        %v806 = vpop.permute.xlu0 %805
        %807 = vrot.lane.b32.xlu0 %v782, 32
        %v808 = vpop.permute.xlu0 %807
        %809 = vrot.lane.b32.xlu0 %v783, 32
        %v810 = vpop.permute.xlu0 %809
        %811 = vrot.lane.b32.xlu0 %v784, 32
        %v812 = vpop.permute.xlu0 %811
        %v817 = vsel %vm298, %v773, %v790
        %v818 = vsel %vm298, %v774, %v792
        %v819 = vsel %vm298, %v775, %v794
        %v820 = vsel %vm298, %v776, %v796
        %v821 = vsel %vm352, %v817, %v806
        %v822 = vsel %vm352, %v818, %v808
        %v823 = vsel %vm352, %v819, %v810
        %v824 = vsel %vm352, %v820, %v812
        %v825 = vpack.c.bf16 %v822, %v821
        %v826 = vpack.c.bf16 %v824, %v823
        %s827 = scalar_lea.vmem [#allocation7], 72
        %v828 = vld [vmem:[%s827] sm:$0xf]
        %v829 = vld [vmem:[%s827 + $0x4] sm:$0xf]
        %v830 = vld [vmem:[%s827 + $0x8] sm:$0xf]
        %v831 = vld [vmem:[%s827 + $0xc] sm:$0xf]
        %v832 = vld [vmem:[%s827 + $0x10] sm:$0xf]
        %v833 = vld [vmem:[%s827 + $0x14] sm:$0xf]
        %v834 = vld [vmem:[#allocation9 + $0x3] sm:$0x1]
        %v835 = vlaneseq
        %v836 = vshrl.u32 %v835, 7
        %v837 = vsub.s32 0, %v836
        %v838 = vrot.slane %v834, %v837
        %v845 = vunpack.c.l.b16 %v828
        %v846 = vunpack.c.l.b16 %v829
        %v847 = vunpack.c.l.b16 %v830
        %v848 = vunpack.c.l.b16 %v831
        %v849 = vunpack.c.l.b16 %v832
        %v850 = vunpack.c.l.b16 %v833
        %v851 = vpack.c.b16 %v846, %v845
        %v852 = vpack.c.b16 %v848, %v847
        %v853 = vpack.c.b16 %v850, %v849
        %v858 = vsel %vm388, %v825, 0
        %v861 = vsel %vm388, %v826, 0
        %863 = vmatprep.subr.bf16.mxu0 0
        %864 = vmatpush1.bf16.msra.mxu0 %v851
        %865 = vmatprep.subr.bf16.mxu0 0
        %866 = vmatpush1.bf16.msra.mxu0 %v852
        %867 = vmatprep.subr.bf16.mxu0 0
        %868 = vmatpush1.bf16.msra.mxu0 %v853
        %869 = vmatprep.subr.bf16.mxu0 0
        %870 = vmatpush1.bf16.msra.mxu0 0
        %871 = vmatprep.subr.bf16.mxu0 0
        %872 = vmatpush1.bf16.msra.mxu0 0
        %873 = vmatprep.subr.bf16.mxu0 0
        %874 = vmatpush1.bf16.msra.mxu0 0
        %875 = vmatprep.subr.bf16.mxu0 0
        %876 = vmatpush1.bf16.msra.mxu0 0
        %877 = vmatprep.subr.bf16.mxu0 0
        %878 = vmatpush1.bf16.msra.mxu0 0
        %879 = vmatprep.subr.bf16.mxu0 0
        %880 = vmatpush1.bf16.msra.mxu0 0
        %881 = vmatprep.subr.bf16.mxu0 0
        %882 = vmatpush1.bf16.msra.mxu0 0
        %883 = vmatprep.subr.bf16.mxu0 0
        %884 = vmatpush1.bf16.msra.mxu0 0
        %885 = vmatprep.subr.bf16.mxu0 0
        %886 = vmatpush1.bf16.msra.mxu0 0
        %887 = vmatprep.subr.bf16.mxu0 0
        %888 = vmatpush1.bf16.msra.mxu0 0
        %889 = vmatprep.subr.bf16.mxu0 0
        %890 = vmatpush1.bf16.msra.mxu0 0
        %891 = vmatprep.subr.bf16.mxu0 0
        %892 = vmatpush1.bf16.msra.mxu0 0
        %893 = vmatprep.subr.bf16.mxu0 0
        %894 = vmatpush1.bf16.msra.mxu0 0
        %895 = vmatprep.mubr.bf16.mxu0 0
        %896 = vmatmul.mubr.bf16.gmra.mrb[0].mxu0 %v858
        %v897 = vpop.f32.mrb[0].mxu0
        %v898 = vadd.f32 %v838, %v897
        %v899 = vpop.f32.mrb[0].mxu0
        %v900 = vpop.f32.mrb[0].mxu0
        %v901 = vadd.f32 %v838, %v900
        %v902 = vpop.f32.mrb[0].mxu0
        %903 = vmatprep.mubr.bf16.mxu0 0
        %904 = vmatmul.mubr.bf16.gmra.mrb[0].mxu0 %v861
        %v905 = vpop.f32.mrb[0].mxu0
        %v906 = vadd.f32 %v838, %v905
        %v907 = vpop.f32.mrb[0].mxu0
        %v908 = vpop.f32.mrb[0].mxu0
        %v909 = vadd.f32 %v838, %v908
        %v910 = vpop.f32.mrb[0].mxu0
        %911 = vdwg.mxu0
        %s912 = sld [smem:[#allocation10 + $0x3]]
        %vm913 = vcmp.gt.f32.partialorder %v898, 0.0
        %vm914 = vcmp.gt.f32.partialorder %v901, 0.0
        %vm915 = vcmp.gt.f32.partialorder %v906, 0.0
        %vm916 = vcmp.gt.f32.partialorder %v909, 0.0
        %v917 = vstv %s912
        %v918 = vmul.f32 %v917, %v898
        %v919 = vmul.f32 %v917, %v901
        %v920 = vmul.f32 %v917, %v906
        %v921 = vmul.f32 %v917, %v909
        %v922 = vsel %vm913, %v898, %v918
        %v923 = vsel %vm914, %v901, %v919
        %v924 = vsel %vm915, %v906, %v920
        %v925 = vsel %vm916, %v909, %v921
        %926 = vst.msk [vmem:[#allocation2 + $0x8] sm:$0xff] %vm298, %v922
        %927 = vst.msk [vmem:[#allocation2 + $0x10] sm:$0xff] %vm298, %v923
        %928 = vst.msk [vmem:[#allocation2 + $0x18] sm:$0xff] %vm298, %v924
        %929 = vst.msk [vmem:[#allocation2 + $0x20] sm:$0xff] %vm298, %v925
        %v930 = vld [vmem:[#allocation2 + $0x8] sm:$0xff]
        %v931 = vld [vmem:[#allocation2 + $0x10] sm:$0xff]
        %v932 = vld [vmem:[#allocation2 + $0x18] sm:$0xff]
        %v933 = vld [vmem:[#allocation2 + $0x20] sm:$0xff]
        %v934 = vpack.c.bf16 %v931, %v930
        %v935 = vpack.c.bf16 %v933, %v932
        %v936 = vld [vmem:[#allocation11] sm:$0xf]
        %v937 = vld [vmem:[#allocation11 + $0x4] sm:$0xf]
        %v940 = vunpack.c.l.b16 %v936
        %v941 = vunpack.c.l.b16 %v937
        %v942 = vpack.c.b16 %v941, %v940
        %v945 = vsel %vm298, %v934, 0
        %v948 = vsel %vm298, %v935, 0
        %950 = vmatprep.subr.bf16.mxu0 0
        %951 = vmatpush1.bf16.msra.mxu0 %v942
        %952 = vmatprep.subr.bf16.mxu0 0
        %953 = vmatpush1.bf16.msra.mxu0 0
        %954 = vmatprep.subr.bf16.mxu0 0
        %955 = vmatpush1.bf16.msra.mxu0 0
        %956 = vmatprep.subr.bf16.mxu0 0
        %957 = vmatpush1.bf16.msra.mxu0 0
        %958 = vmatprep.subr.bf16.mxu0 0
        %959 = vmatpush1.bf16.msra.mxu0 0
        %960 = vmatprep.subr.bf16.mxu0 0
        %961 = vmatpush1.bf16.msra.mxu0 0
        %962 = vmatprep.subr.bf16.mxu0 0
        %963 = vmatpush1.bf16.msra.mxu0 0
        %964 = vmatprep.subr.bf16.mxu0 0
        %965 = vmatpush1.bf16.msra.mxu0 0
        %966 = vmatprep.subr.bf16.mxu0 0
        %967 = vmatpush1.bf16.msra.mxu0 0
        %968 = vmatprep.subr.bf16.mxu0 0
        %969 = vmatpush1.bf16.msra.mxu0 0
        %970 = vmatprep.subr.bf16.mxu0 0
        %971 = vmatpush1.bf16.msra.mxu0 0
        %972 = vmatprep.subr.bf16.mxu0 0
        %973 = vmatpush1.bf16.msra.mxu0 0
        %974 = vmatprep.subr.bf16.mxu0 0
        %975 = vmatpush1.bf16.msra.mxu0 0
        %976 = vmatprep.subr.bf16.mxu0 0
        %977 = vmatpush1.bf16.msra.mxu0 0
        %978 = vmatprep.subr.bf16.mxu0 0
        %979 = vmatpush1.bf16.msra.mxu0 0
        %980 = vmatprep.subr.bf16.mxu0 0
        %981 = vmatpush1.bf16.msra.mxu0 0
        %982 = vmatprep.mubr.bf16.mxu0 0
        %983 = vmatmul.mubr.bf16.gmra.mrb[0].mxu0 %v945
        %v984 = vpop.f32.mrb[0].mxu0
        %v985 = vadd.f32 0.0, %v984
        %v986 = vpop.f32.mrb[0].mxu0
        %v987 = vpop.f32.mrb[0].mxu0
        %v988 = vadd.f32 0.0, %v987
        %v989 = vpop.f32.mrb[0].mxu0
        %990 = vmatprep.mubr.bf16.mxu0 0
        %991 = vmatmul.mubr.bf16.gmra.mrb[0].mxu0 %v948
        %v992 = vpop.f32.mrb[0].mxu0
        %v993 = vadd.f32 0.0, %v992
        %v994 = vpop.f32.mrb[0].mxu0
        %v995 = vpop.f32.mrb[0].mxu0
        %v996 = vadd.f32 0.0, %v995
        %v997 = vpop.f32.mrb[0].mxu0
        %998 = vdwg.mxu0
        %999 = vst.msk [vmem:[%s296] sm:$0xff] %vm298, %v985
        %1000 = vst.msk [vmem:[%s296 + $0x8] sm:$0xff] %vm298, %v988
        %1001 = vst.msk [vmem:[%s296 + $0x10] sm:$0xff] %vm298, %v993
        %1002 = vst.msk [vmem:[%s296 + $0x18] sm:$0xff] %vm298, %v996
        %s1003 = sand.u32 %s143, 1
        %s1004 = scalar_lea.sflag [#allocation5], %s1003
        %s1005 = sand.u32 %s143, 1
        %s1006 = smul.addr %s1005, 32
        %s1007 = scalar_lea.vmem [#allocation13], %s1006
        // Predicated region
        $region61: #{tpu_custom_call.1} parent=39 // pred_check
          %p1008 = pneg %p153
        $region62: #{tpu_custom_call.1} parent=39 // pred_check_branch
          %1010 = sbr.rel (%p1008) target = $region64
        $region63: #{tpu_custom_call.1} parent=39 // pred_region
          %s1012 = ssub.s32 512, 512
          %1013 = vsyncadd %s1004, %s1012
          %s1014 = smul.addr %s25, 4
          %s1015 = smul.addr %s1014, 128
          %s1016 = scalar_lea.hbm %s5, %s1015
          %s1017 = sshll.u32 %s1007, 4
          %s1018 = int_to_ptr.vmem [resolvable:$true] %s1017
          %1023 = dma.vmem_to_hbm [thread:$0]  %s1018, 512, %s1016, %s1004, 128, 128, 8
        $region64: #{tpu_custom_call.1} parent=39 // pred_fallthru
          _
      $region40: #{tpu_custom_call.1} parent=5 // pred_fallthru
        _
      %p1024 = scmp.le.s32.totalorder 2, %s20
      // Predicated region
      $region65: #{tpu_custom_call.1} parent=5 // pred_check
        %p1025 = pneg %p1024
      $region66: #{tpu_custom_call.1} parent=5 // pred_check_branch
        %1027 = sbr.rel (%p1025) target = $region68
      $region67: #{tpu_custom_call.1} parent=5 // pred_region
        %s1028 = ssub.s32 %s20, 2
        // Predicated region
        $region69: #{tpu_custom_call.1} parent=67 // pred_check
          %p1029 = pneg %p159
        $region70: #{tpu_custom_call.1} parent=67 // pred_check_branch
          %1031 = sbr.rel (%p1029) target = $region72
        $region71: #{tpu_custom_call.1} parent=67 // pred_region
          %s1032 = sand.u32 %s144, 1
          %s1033 = scalar_lea.sflag [#allocation5], %s1032
          %s1034 = sand.u32 %s144, 1
          %s1035 = smul.addr %s1034, 32
          %s1036 = scalar_lea.vmem [#allocation13], %s1035
          %1037 = dma.done %s1033, 512
        $region72: #{tpu_custom_call.1} parent=67 // pred_fallthru
          _
      $region68: #{tpu_custom_call.1} parent=5 // pred_fallthru
        _
    $region6: #{tpu_custom_call.1} parent=1 // loop_footer
      %s24 = sadd.s32 1, %s20
    $region7: #{tpu_custom_call.1} parent=1 // loop_footer_branch
      %19 = sbr.rel target = $region3
    $region8: #{tpu_custom_call.1} parent=1 // loop_exit
      _
    %1038 = vsyncpa [#allocation4], 1
    %s1039 = scalar_lea.sflag [#allocation4], 1
    %1040 = vsyncpa %s1039, 1
    %1041 = vsyncpa [#allocation8], 1
    %1042 = vsyncpa [#allocation12], 1
    %1043 = vsyncpa [#allocation5], 1
    %s1044 = scalar_lea.sflag [#allocation5], 1
    %1045 = vsyncpa %s1044, 1
    %1046 = vsyncpa [#allocation6], 1
    %s1047 = scalar_lea.sflag [#allocation6], 1
    %1048 = vsyncpa %s1047, 1

</llo_original>
